<compile_context>
chip_gen: v7x
topology: tpu7x:2x2x1
jax: 0.10.0
libtpu: 0.0.40
codegen_flags: <defaults>
</compile_context>

<pallas_src>
import functools

import jax
import jax.numpy as jnp
from jax.experimental import pallas as pl
from jax.experimental.pallas import tpu as pltpu


# --------------------------------------------------------------------------
# Kernel 1: per-(n, split, c) spatial sum, accumulated across S tiles.
# --------------------------------------------------------------------------
def _chan_sum_kernel(x_ref, sum_ref):
    # x_ref:   (1, C, TS)     current spatial tile of one batch element
    # sum_ref: (1, 1, C, 1)   resident accumulator for this (n, split)
    @pl.when(pl.program_id(2) == 0)
    def _():
        sum_ref[...] = jnp.zeros_like(sum_ref)

    part = jnp.sum(x_ref[0].astype(jnp.float32), axis=1, keepdims=True)  # (C,1)
    sum_ref[0, 0] = sum_ref[0, 0] + part


# --------------------------------------------------------------------------
# Kernel 2: fused cSE-MLP + sSE gating, tiled over S.
# --------------------------------------------------------------------------
def _gate_kernel(x_ref, ps_ref, w1t_ref, b1_ref, w2_ref, b2_ref, ws_ref,
                 bs_ref, o_ref, *, n_split, inv_s):
    # x_ref:   (1, C, TS)          input tile (native dtype, e.g. f32/bf16)
    # ps_ref:  (1, n_split, C, 1)  partial channel sums (f32)
    # w1t_ref: (C, Cr)  b1_ref: (1, Cr)  w2_ref: (C, Cr)  b2_ref: (C, 1)
    # ws_ref:  (C, 1)              spatial 1x1x1 conv weight
    # bs_ref:  (1,) in SMEM        spatial conv bias (scalar)
    # o_ref:   (1, C, TS)

    # ---- cSE gate recomputed from pre-reduced sums (tiny; hidden by DMA) ---
    sums = ps_ref[0, 0]                                       # (C, 1) f32
    for p in range(1, n_split):                               # static unroll
        sums = sums + ps_ref[0, p]
    mean = sums * inv_s                                       # (C, 1)
    h = jnp.maximum(
        jnp.sum(mean * w1t_ref[...], axis=0, keepdims=True) + b1_ref[...],
        0.0)                                                  # (1, Cr)
    c_logit = (jnp.sum(h * w2_ref[...], axis=1, keepdims=True)
               + b2_ref[...])                                 # (C, 1)
    c_gate = jax.nn.sigmoid(c_logit)                          # (C, 1) f32

    # ---- sSE: 1x1x1 conv over channels == sublane multiply-reduce ----------
    x = x_ref[0]                                              # (C, TS) native
    s_logit = (jnp.sum(x.astype(jnp.float32) * ws_ref[...], axis=0,
                       keepdims=True) + bs_ref[0])            # (1, TS) f32
    s_gate = jax.nn.sigmoid(s_logit)

    # ---- fused combine: x*s + x*c == x*(s + c); one gate cast to x dtype ---
    gate = (s_gate + c_gate).astype(x.dtype)                  # (C, TS)
    o_ref[0] = (x * gate).astype(o_ref.dtype)


# --------------------------------------------------------------------------
# Spatial tile selection: big (~2 MiB) blocks, avoid padding when possible.
# --------------------------------------------------------------------------
def _pick_spatial_tile(S, C, itemsize, lane_tile):
    """Returns (TS, S_pad).  Prefers TS == S (single block) or a
    multiple-of-128 divisor of S so no pad/slice copies are needed."""
    target_block_bytes = 2 << 20                 # ~2 MiB per x block
    cap = (target_block_bytes // (C * itemsize)) // 128 * 128
    cap = max(128, min(int(lane_tile), cap))
    if S <= cap:
        return S, S                              # single full-extent block
    if S % 128 == 0:
        q, limit = S // 128, cap // 128
        best = best_even = 0
        for d in range(limit, 0, -1):
            if q % d == 0:
                if best == 0:
                    best = d
                if best_even == 0 and (q // d) % 2 == 0:
                    best_even = d
                if best and best_even:
                    break
        # Prefer an even tile count (splits across 2 TensorCores) if it does
        # not shrink the tile by more than 2x.
        if best_even and best_even * 2 >= best:
            best = best_even
        best *= 128
        if best >= max(cap // 8, 128):
            return best, S                       # tile divides S exactly
    s_pad = ((S + cap - 1) // cap) * cap         # rare fallback: zero-pad
    return cap, s_pad


# --------------------------------------------------------------------------
# Wrapper
# --------------------------------------------------------------------------
def scse_gate(x, w1, b1, w2, b2, ws, bs, *, lane_tile=32768, in_place=False):
    """scSE gate.  x: (N, C, D, H, W) -> same shape.

    w1: (Cr, C[,1,1,1]), b1: (Cr,), w2: (C, Cr[,1,1,1]), b2: (C,),
    ws: (C[,1,1,1]), bs: (1,).
    """
    N, C, D, H, W = x.shape
    Cr = w1.shape[0]
    S = D * H * W
    itemsize = x.dtype.itemsize

    TS, S_pad = _pick_spatial_tile(S, C, itemsize, lane_tile)
    n_tiles = S_pad // TS

    x_flat = x.reshape(N, C, S)
    if S_pad != S:
        # Fallback only: zero padding does not perturb the channel sums and
        # padded output lanes are sliced off below.
        x_flat = jnp.pad(x_flat, ((0, 0), (0, 0), (0, S_pad - S)))

    # Split the S axis of pass 1 into two parallel halves so both TensorCores
    # (v7x) have work even when N == 1.
    n_split = 2 if (n_tiles >= 2 and n_tiles % 2 == 0) else 1
    tiles_per_split = n_tiles // n_split

    # Scoped-VMEM budget: double-buffered in + out blocks plus f32 temps.
    vmem_limit = int(min(60 << 20,
                         max(32 << 20,
                             6 * C * TS * max(itemsize, 4) + (4 << 20))))

    # ---- Pass 1: partial channel sums (tiled + split over S) ---------------
    partial_sums = pl.pallas_call(
        _chan_sum_kernel,
        out_shape=jax.ShapeDtypeStruct((N, n_split, C, 1), jnp.float32),
        grid_spec=pltpu.PrefetchScalarGridSpec(
            num_scalar_prefetch=0,
            grid=(N, n_split, tiles_per_split),
            in_specs=[pl.BlockSpec(
                (1, C, TS),
                lambda n, p, t: (n, 0, p * tiles_per_split + t))],
            out_specs=pl.BlockSpec((1, 1, C, 1), lambda n, p, t: (n, p, 0, 0)),
        ),
        compiler_params=pltpu.CompilerParams(
            dimension_semantics=("parallel", "parallel", "arbitrary"),
            vmem_limit_bytes=vmem_limit),
        cost_estimate=pl.CostEstimate(
            flops=N * C * S_pad, transcendentals=0,
            bytes_accessed=N * C * S_pad * itemsize),
    )(x_flat)

    # ---- Small resident parameters for pass 2 ------------------------------
    w1t = w1.reshape(Cr, C).T.astype(jnp.float32)        # (C, Cr)
    b1r = b1.reshape(1, Cr).astype(jnp.float32)          # (1, Cr)
    w2r = w2.reshape(C, Cr).astype(jnp.float32)          # (C, Cr)
    b2r = b2.reshape(C, 1).astype(jnp.float32)           # (C, 1)
    ws_col = ws.reshape(C, 1).astype(jnp.float32)        # (C, 1)
    bs_smem = bs.reshape(1).astype(jnp.float32)          # (1,) -> SMEM

    gate_kernel = functools.partial(_gate_kernel, n_split=n_split,
                                    inv_s=1.0 / float(S))

    extra_kwargs = {}
    if in_place:
        # Overwrite x_flat's buffer with the gated result (no extra HBM
        # output allocation). Only use when the caller does not reuse x.
        extra_kwargs["input_output_aliases"] = {0: 0}

    # ---- Pass 2: fused gating kernel, tiled over S --------------------------
    out = pl.pallas_call(
        gate_kernel,
        out_shape=jax.ShapeDtypeStruct((N, C, S_pad), x.dtype),
        grid_spec=pltpu.PrefetchScalarGridSpec(
            num_scalar_prefetch=0,
            grid=(N, n_tiles),
            in_specs=[
                pl.BlockSpec((1, C, TS), lambda n, s: (n, 0, s)),            # x
                pl.BlockSpec((1, n_split, C, 1), lambda n, s: (n, 0, 0, 0)), # sums
                pl.BlockSpec((C, Cr), lambda n, s: (0, 0)),                  # w1^T
                pl.BlockSpec((1, Cr), lambda n, s: (0, 0)),                  # b1
                pl.BlockSpec((C, Cr), lambda n, s: (0, 0)),                  # w2
                pl.BlockSpec((C, 1), lambda n, s: (0, 0)),                   # b2
                pl.BlockSpec((C, 1), lambda n, s: (0, 0)),                   # ws
                pl.BlockSpec(memory_space=pltpu.MemorySpace.SMEM),           # bs
            ],
            out_specs=pl.BlockSpec((1, C, TS), lambda n, s: (n, 0, s)),
        ),
        compiler_params=pltpu.CompilerParams(
            dimension_semantics=("parallel", "parallel"),
            vmem_limit_bytes=vmem_limit),
        cost_estimate=pl.CostEstimate(
            flops=6 * N * C * S_pad,
            transcendentals=2 * N * S_pad,      # sigmoid = exp + reciprocal
            bytes_accessed=2 * N * C * S_pad * itemsize),
        **extra_kwargs,
    )(x_flat, partial_sums, w1t, b1r, w2r, b2r, ws_col, bs_smem)

    if S_pad != S:
        out = out[:, :, :S]
    return out.reshape(N, C, D, H, W)


# --------------------------------------------------------------------------
# Pure-JAX reference mirroring the PyTorch module (computed in f32).
# --------------------------------------------------------------------------
def reference(x, w1, b1, w2, b2, ws, bs):
    N, C, D, H, W = x.shape
    Cr = w1.shape[0]
    xf = x.astype(jnp.float32)
    # Channel gate (cSE)
    mean = xf.mean(axis=(2, 3, 4))                            # (N, C)
    h = jnp.maximum(mean @ w1.reshape(Cr, C).T + b1, 0.0)     # (N, Cr)
    cg = jax.nn.sigmoid(h @ w2.reshape(C, Cr).T + b2)         # (N, C)
    cSE = xf * cg[:, :, None, None, None]
    # Spatial gate (sSE)
    sl = jnp.einsum('ncdhw,c->ndhw', xf,
                    ws.reshape(C).astype(jnp.float32)) + bs.reshape(())
    sSE = xf * jax.nn.sigmoid(sl)[:, None]
    return sSE + cSE


if __name__ == "__main__":
    key = jax.random.PRNGKey(0)

    C, reduction = 16, 8
    Cr = C // reduction

    kp, kx1, kx2, kx3 = jax.random.split(key, 4)
    k1, k2, k3, k4, k5, k6 = jax.random.split(kp, 6)
    w1 = 0.1 * jax.random.normal(k1, (Cr, C), dtype=jnp.float32)   # fc1 weight
    b1 = 0.05 * jax.random.normal(k2, (Cr,), dtype=jnp.float32)    # fc1 bias
    w2 = 0.1 * jax.random.normal(k3, (C, Cr), dtype=jnp.float32)   # fc2 weight
    b2 = 0.05 * jax.random.normal(k4, (C,), dtype=jnp.float32)     # fc2 bias
    ws = 0.1 * jax.random.normal(k5, (C,), dtype=jnp.float32)      # sSE conv weight
    bs = 0.05 * jax.random.normal(k6, (1,), dtype=jnp.float32)     # sSE conv bias
    params = (w1, b1, w2, b2, ws, bs)

    # 1) Default path: small volume -> single full-S block, no padding.
    x1 = jax.random.normal(kx1, (2, C, 8, 8, 8), dtype=jnp.float32)
    out1 = scse_gate(x1, *params)
    jax.block_until_ready(out1)
    ref1 = reference(x1, *params)
    assert out1.shape == x1.shape
    assert jnp.allclose(out1, ref1, atol=1e-5, rtol=1e-5), "mismatch (case 1)"

    # 2) Multi-tile + parallel S-split path (forced via tiny lane_tile), N=1.
    x2 = jax.random.normal(kx2, (1, C, 4, 8, 16), dtype=jnp.float32)
    out2 = scse_gate(x2, *params, lane_tile=128)
    jax.block_until_ready(out2)
    ref2 = reference(x2, *params)
    assert jnp.allclose(out2, ref2, atol=1e-5, rtol=1e-5), "mismatch (case 2)"

    # 3) Ragged-S fallback (zero padding) path.
    x3 = jax.random.normal(kx3, (2, C, 3, 7, 11), dtype=jnp.float32)
    out3 = scse_gate(x3, *params, lane_tile=128)
    jax.block_until_ready(out3)
    ref3 = reference(x3, *params)
    assert jnp.allclose(out3, ref3, atol=1e-5, rtol=1e-5), "mismatch (case 3)"

    # 4) bf16 input path (gate applied in bf16, reductions kept in f32).
    x4 = x1.astype(jnp.bfloat16)
    out4 = scse_gate(x4, *params)
    jax.block_until_ready(out4)
    ref4 = reference(x4, *params)
    assert out4.dtype == jnp.bfloat16
    assert jnp.allclose(out4.astype(jnp.float32), ref4,
                        atol=5e-2, rtol=5e-2), "mismatch (case 4)"

    print("KERNEL_OK")
</pallas_src>

<mosaic_0001>
module attributes {stable_mosaic.version = 11 : i64} {
  func.func @_chan_sum_kernel(%arg0: i32, %arg1: i32, %arg2: i32, %arg3: memref<1x16x512xf32, #tpu.memory_space<vmem>>, %arg4: memref<1x1x16x1xf32, #tpu.memory_space<vmem>>) attributes {dimension_semantics = [#tpu.dimension_semantics<parallel>, #tpu.dimension_semantics<parallel>, #tpu.dimension_semantics<arbitrary>], iteration_bounds = array<i64: 2, 1, 1>, scalar_prefetch = 0 : i64, scratch_operands = 0 : i64, tpu.core_type = #tpu.core_type<tc>, window_params = [{transform_indices = @transform_0, window_bounds = array<i64: 1, 16, 512>}, {transform_indices = @transform_1, window_bounds = array<i64: 1, 1, 16, 1>}]} {
    %c0_i32 = arith.constant 0 : i32
    %0 = arith.cmpi eq, %arg2, %c0_i32 : i32
    %1 = arith.extui %0 : i1 to i32
    %c0_i32_0 = arith.constant 0 : i32
    %2 = arith.cmpi ne, %1, %c0_i32_0 : i32
    scf.if %2 {
      %cst_11 = arith.constant 0.000000e+00 : f32
      %13 = vector.broadcast %cst_11 : f32 to vector<1x1x16x1xf32>
      %c0_12 = arith.constant 0 : index
      %c0_13 = arith.constant 0 : index
      %c0_14 = arith.constant 0 : index
      %c0_15 = arith.constant 0 : index
      %14 = vector.load %arg4[%c0_12, %c0_13, %c0_14, %c0_15] : memref<1x1x16x1xf32, #tpu.memory_space<vmem>>, vector<1x1x16x1xf32>
      tpu.vector_store %arg4[%c0_12, %c0_13, %c0_14, %c0_15], %13 {strides = array<i32>} : memref<1x1x16x1xf32, #tpu.memory_space<vmem>>, vector<1x1x16x1xf32>,
    } else {
    }
    %c0 = arith.constant 0 : index
    %c0_1 = arith.constant 0 : index
    %c0_2 = arith.constant 0 : index
    %3 = vector.load %arg3[%c0, %c0_1, %c0_2] : memref<1x16x512xf32, #tpu.memory_space<vmem>>, vector<1x16x512xf32>
    %4 = vector.shape_cast %3 : vector<1x16x512xf32> to vector<16x512xf32>
    %cst = arith.constant dense<0.000000e+00> : vector<16xf32>
    %5 = vector.multi_reduction <add>, %4, %cst [1] : vector<16x512xf32> to vector<16xf32>
    %6 = vector.shape_cast %5 : vector<16xf32> to vector<16x1xf32>
    %c0_3 = arith.constant 0 : index
    %c0_4 = arith.constant 0 : index
    %c0_5 = arith.constant 0 : index
    %c0_6 = arith.constant 0 : index
    %7 = vector.load %arg4[%c0_3, %c0_4, %c0_5, %c0_6] : memref<1x1x16x1xf32, #tpu.memory_space<vmem>>, vector<1x1x16x1xf32>
    %8 = vector.shape_cast %7 : vector<1x1x16x1xf32> to vector<16x1xf32>
    %9 = arith.addf %8, %6 : vector<16x1xf32>
    %c0_7 = arith.constant 0 : index
    %c0_8 = arith.constant 0 : index
    %c0_9 = arith.constant 0 : index
    %c0_10 = arith.constant 0 : index
    %10 = vector.load %arg4[%c0_7, %c0_8, %c0_9, %c0_10] : memref<1x1x16x1xf32, #tpu.memory_space<vmem>>, vector<1x1x16x1xf32>
    %11 = vector.shape_cast %10 : vector<1x1x16x1xf32> to vector<16x1xf32>
    %12 = vector.shape_cast %9 : vector<16x1xf32> to vector<1x1x16x1xf32>
    tpu.vector_store %arg4[%c0_7, %c0_8, %c0_9, %c0_10], %12 {strides = array<i32>} : memref<1x1x16x1xf32, #tpu.memory_space<vmem>>, vector<1x1x16x1xf32>,
    return
  }
  func.func @transform_0(%arg0: i32, %arg1: i32, %arg2: i32) -> (i32, i32, i32) {
    %c1_i32 = arith.constant 1 : i32
    %0 = arith.muli %arg1, %c1_i32 : i32
    %1 = arith.addi %0, %arg2 : i32
    %c0_i32 = arith.constant 0 : i32
    %c0_i32_0 = arith.constant 0 : i32
    return %arg0, %c0_i32, %1 : i32, i32, i32
  }
  func.func @transform_1(%arg0: i32, %arg1: i32, %arg2: i32) -> (i32, i32, i32, i32) {
    %c0_i32 = arith.constant 0 : i32
    %c0_i32_0 = arith.constant 0 : i32
    %c0_i32_1 = arith.constant 0 : i32
    return %arg0, %arg1, %c0_i32, %c0_i32_0 : i32, i32, i32, i32
  }
}

</mosaic_0001>

<llo_original>
// kernel: tpu_custom_call.1
$region0: #{tpu_custom_call.1}
  #allocation0 [shape = 'u32[]', space=smem, size = 0x4, offset = 0x4, fixed_abs, tag = 'smem constant byte address 0x4 - core index']
  #allocation1 [shape = 'u32[144,128]{1,0:T(1,128)}', space=vmem, size = 0x12000, scoped, tag = 'internal scratch']
  %s0 = inlined_call_operand.hbm [shape: f32[2,16,512], index: 0, kind: input, shape index: {}]
  %s1 = inlined_call_operand.vmem [shape: f32[2,1,16,1], index: 1, kind: output, shape index: {}]
  %s2 = sld [smem:[#allocation0]]
  $region45: #{tpu_custom_call.1} parent=0
    _
  %s4 = ssub.s32 1, %s2
  %s5 = scalar_select 0, %s4, %s2
  $region1: #{tpu_custom_call.1} parent=0
    #allocation2 [shape = 'u8[65536]{0}', space=vmem, size = 0x10000, scoped, tag = 'input window, operand 0']
    #allocation3 [shape = 's32[2]{0}', space=sflag, size = 0x8, scoped, tag = 'scoped memory for tpu_custom_call.1']
    %6 = vsyncpa [#allocation3], 0
    %s7 = scalar_lea.sflag [#allocation3], 1
    %8 = vsyncpa %s7, 0
    loop: start=0, step=1, limit=4
    $region2: #{tpu_custom_call.1} parent=1 // loop_pre_header
      _
    $region3: #{tpu_custom_call.1} parent=1 // loop_header
      %s10 = sphi 0, %s14
      %p11 = scmp.ge.s32.totalorder %s10, 4
      %s17 = sphi 0, %s36
      %s18 = sphi 0, %s32
      %s19 = sphi 0, %s28
      %s20 = sphi 0, %s17
      %s21 = sphi 0, %s18
      %s22 = sphi 0, %s19
      %s23 = sphi 0, %s20
      %s24 = sphi 0, %s21
      %s25 = sphi 0, %s22
      %s43 = sphi 0, %s45
      %s46 = sphi 0, %s43
      %s47 = sphi 0, %s46
      %s63 = sphi 0, %s47
      %s71 = sphi 0, %s73
      %s74 = sphi 0, %s71
      %s75 = sphi 0, %s74
      %s91 = sphi 0, %s75
    $region4: #{tpu_custom_call.1} parent=1 // loop_header_branch
      %13 = sbr.rel (%p11) target = $region8
    $region5: #{tpu_custom_call.1} parent=1 // loop_body
      %s15 = ssub.s32 %s10, 1
      %s16 = ssub.s32 %s10, 2
      %s26 = sadd.s32 1, %s19
      %p27 = scmp.ge.s32.totalorder %s26, 1
      %s28 = scalar_select %p27, 0, %s26
      %s29 = sadd.s32 1, %s18
      %s30 = scalar_select %p27, %s29, %s18
      %p31 = scmp.ge.s32.totalorder %s30, 1
      %s32 = scalar_select %p31, 0, %s30
      %s33 = sadd.s32 1, %s17
      %s34 = scalar_select %p31, %s33, %s17
      %p35 = scmp.ge.s32.totalorder %s34, 2
      %s36 = scalar_select %p35, 0, %s34
      %s37 = sadd.s32 %s18, %s19
      %s38 = sadd.s32 %s32, %s28
      %s39 = ssub.s32 %s17, %s36
      %s40 = ssub.s32 %s37, %s38
      %s41 = sor.u32 %s39, %s40
      %p42 = scmp.eq.s32.totalorder %s41, 0
      %s44 = sadd.s32 %s43, 1
      %s45 = scalar_select %p42, %s43, %s44
      %p48 = pneg %p42
      %p49 = scmp.eq.s32.totalorder %s10, 1
      %p50 = por %p48, %p49
      %p51 = scmp.ne.s32.totalorder %s43, %s46
      %p52 = scmp.eq.s32.totalorder %s10, 0
      %p53 = por %p51, %p52
      %p54 = scmp.ne.s32.totalorder %s43, %s46
      %p55 = scmp.eq.s32.totalorder %s15, 1
      %p56 = por %p54, %p55
      %p57 = scmp.ne.s32.totalorder %s46, %s47
      %p58 = scmp.eq.s32.totalorder %s15, 0
      %p59 = por %p57, %p58
      %p60 = scmp.ne.s32.totalorder %s46, %s47
      %p61 = scmp.eq.s32.totalorder %s16, 1
      %p62 = por %p60, %p61
      %p64 = scmp.ne.s32.totalorder %s47, %s63
      %p65 = scmp.eq.s32.totalorder %s16, 0
      %p66 = por %p64, %p65
      %s67 = ssub.s32 %s17, %s36
      %s68 = ssub.s32 %s18, %s32
      %s69 = sor.u32 %s67, %s68
      %p70 = scmp.eq.s32.totalorder %s69, 0
      %s72 = sadd.s32 %s71, 1
      %s73 = scalar_select %p70, %s71, %s72
      %p76 = pneg %p70
      %p77 = scmp.eq.s32.totalorder %s10, 1
      %p78 = por %p76, %p77
      %p79 = scmp.ne.s32.totalorder %s71, %s74
      %p80 = scmp.eq.s32.totalorder %s10, 0
      %p81 = por %p79, %p80
      %p82 = scmp.ne.s32.totalorder %s71, %s74
      %p83 = scmp.eq.s32.totalorder %s15, 1
      %p84 = por %p82, %p83
      %p85 = scmp.ne.s32.totalorder %s74, %s75
      %p86 = scmp.eq.s32.totalorder %s15, 0
      %p87 = por %p85, %p86
      %p88 = scmp.ne.s32.totalorder %s74, %s75
      %p89 = scmp.eq.s32.totalorder %s16, 1
      %p90 = por %p88, %p89
      %p92 = scmp.ne.s32.totalorder %s75, %s91
      %p93 = scmp.eq.s32.totalorder %s16, 0
      %p94 = por %p92, %p93
      %p95 = scmp.le.s32.totalorder 1, %s10
      %p96 = scmp.lt.s32.totalorder %s10, 3
      %p97 = pnand %p95, %p96
      %p98 = pneg %p97
      // Predicated region
      $region9: #{tpu_custom_call.1} parent=5 // pred_check
        _
      $region10: #{tpu_custom_call.1} parent=5 // pred_check_branch
        %100 = sbr.rel (%p97) target = $region12
      $region11: #{tpu_custom_call.1} parent=5 // pred_region
        %s101 = ssub.s32 %s10, 1
      $region12: #{tpu_custom_call.1} parent=5 // pred_fallthru
        _
      %p102 = scmp.lt.s32.totalorder %s10, 2
      // Predicated region
      $region13: #{tpu_custom_call.1} parent=5 // pred_check
        %p103 = pneg %p102
      $region14: #{tpu_custom_call.1} parent=5 // pred_check_branch
        %105 = sbr.rel (%p103) target = $region16
      $region15: #{tpu_custom_call.1} parent=5 // pred_region
        // Predicated region
        $region17: #{tpu_custom_call.1} parent=15 // pred_check
          %p106 = pneg %p53
        $region18: #{tpu_custom_call.1} parent=15 // pred_check_branch
          %108 = sbr.rel (%p106) target = $region20
        $region19: #{tpu_custom_call.1} parent=15 // pred_region
          %s109 = sand.u32 %s43, 1
          %s110 = scalar_lea.sflag [#allocation3], %s109
          %s111 = sand.u32 %s43, 1
          %s112 = smul.addr %s111, 64
          %s113 = scalar_lea.vmem [#allocation2], %s112
          %s114 = sadd.s32 %s18, %s19
          %s115 = smul.u32 4, %s114
          %s117 = ssub.s32 1024, 1024
          %118 = vsyncadd %s110, %s117
          %s119 = smul.addr %s17, 8
          %s120 = sadd.s32 %s115, %s119
          %s121 = smul.addr %s120, 128
          %s122 = scalar_lea.hbm %s0, %s121
          %s123 = sshll.u32 %s113, 4
          %s124 = int_to_ptr.vmem [resolvable:$true] %s123
          %129 = dma.hbm_to_vmem [thread:$0]  %s122, 1024, %s124, %s110, 512, 512, 32
        $region20: #{tpu_custom_call.1} parent=15 // pred_fallthru
          _
      $region16: #{tpu_custom_call.1} parent=5 // pred_fallthru
        _
      %p130 = scmp.le.s32.totalorder 1, %s10
      %p131 = scmp.lt.s32.totalorder %s10, 3
      %p132 = pnand %p130, %p131
      %p133 = pneg %p132
      // Predicated region
      $region21: #{tpu_custom_call.1} parent=5 // pred_check
        _
      $region22: #{tpu_custom_call.1} parent=5 // pred_check_branch
        %135 = sbr.rel (%p132) target = $region24
      $region23: #{tpu_custom_call.1} parent=5 // pred_region
        %s136 = ssub.s32 %s10, 1
        %s137 = sand.u32 %s46, 1
        %s138 = scalar_lea.sflag [#allocation3], %s137
        %s139 = sand.u32 %s46, 1
        %s140 = smul.addr %s139, 64
        %s141 = scalar_lea.vmem [#allocation2], %s140
        // Predicated region
        $region25: #{tpu_custom_call.1} parent=23 // pred_check
          %p142 = pneg %p59
        $region26: #{tpu_custom_call.1} parent=23 // pred_check_branch
          %144 = sbr.rel (%p142) target = $region28
        $region27: #{tpu_custom_call.1} parent=23 // pred_region
          %145 = dma.done %s138, 1024
        $region28: #{tpu_custom_call.1} parent=23 // pred_fallthru
          _
        %s146 = sand.u32 %s46, 1
        %s147 = scalar_lea.sflag [#allocation3], %s146
        %s148 = sand.u32 %s46, 1
        %s149 = smul.addr %s148, 64
        %s150 = scalar_lea.vmem [#allocation2], %s149
        %p151 = pneg %p59
        %p152 = pneg %p56
        %p153 = pneg %p87
        %p154 = pneg %p84
        %p155 = scmp.lt.s32.totalorder %s20, 1
        %s156 = scalar_select %p155, %s20, 1
        %p157 = scmp.lt.s32.totalorder %s21, 0
        %s158 = scalar_select %p157, %s21, 0
        %s159 = smul.addr %s158, 2
        %s160 = smul.addr %s156, 2
        %s161 = sadd.s32 %s159, %s160
        %s162 = smul.addr %s161, 8
        %s163 = scalar_lea.vmem %s1, %s162
        %s164 = sadd.s32 %s21, %s22
        %s165 = smul.u32 4, %s164
        %p166 = scmp.lt.s32.totalorder %s20, 1
        %s167 = scalar_select %p166, %s20, 1
        %p168 = scmp.lt.s32.totalorder %s21, 0
        %s169 = scalar_select %p168, %s21, 0
        %s170 = smul.addr %s169, 2
        %s171 = smul.addr %s167, 2
        %s172 = sadd.s32 %s170, %s171
        %s173 = smul.addr %s172, 8
        %s174 = scalar_lea.vmem %s1, %s173
        %p175 = scmp.eq.s32.totalorder %s22, 0
        // Predicated region
        $region29: #{tpu_custom_call.1} parent=23 // pred_check
          %p176 = pneg %p175
        $region30: #{tpu_custom_call.1} parent=23 // pred_check_branch
          %178 = sbr.rel (%p176) target = $region32
        $region31: #{tpu_custom_call.1} parent=23 // pred_region
          %vm179 = vcmask 7168
          %180 = vst.msk [vmem:[%s174] sm:$0xff] %vm179, 0.0
          %181 = vst.msk [vmem:[%s174 + $0x8] sm:$0xff] %vm179, 0.0
        $region32: #{tpu_custom_call.1} parent=23 // pred_fallthru
          _
        %v182 = vld [vmem:[%s141] sm:$0xff]
        %v183 = vld [vmem:[%s141 + $0x8] sm:$0xff]
        %v184 = vld [vmem:[%s141 + $0x10] sm:$0xff]
        %v185 = vld [vmem:[%s141 + $0x18] sm:$0xff]
        %v186 = vld [vmem:[%s141 + $0x20] sm:$0xff]
        %v187 = vld [vmem:[%s141 + $0x28] sm:$0xff]
        %v188 = vld [vmem:[%s141 + $0x30] sm:$0xff]
        %v189 = vld [vmem:[%s141 + $0x38] sm:$0xff]
        %v190 = vadd.f32 %v182, %v183
        %v191 = vadd.f32 %v190, %v184
        %v192 = vadd.f32 %v191, %v185
        %193 = vadd.xlane.f32.xlu0 %v192
        %v194 = vpop.xlane.xlu0 %193
        %v195 = vadd.f32 %v186, %v187
        %v196 = vadd.f32 %v195, %v188
        %v197 = vadd.f32 %v196, %v189
        %198 = vadd.xlane.f32.xlu0 %v197
        %v199 = vpop.xlane.xlu0 %198
        %v200 = vld [vmem:[%s174] sm:$0xff]
        %v201 = vld [vmem:[%s174 + $0x8] sm:$0xff]
        %v202 = vadd.f32 %v200, %v194
        %v203 = vadd.f32 %v201, %v199
        %vm204 = vcmask 7168
        %205 = vst.msk [vmem:[%s174] sm:$0xff] %vm204, %v202
        %206 = vst.msk [vmem:[%s174 + $0x8] sm:$0xff] %vm204, %v203
        %p207 = scmp.lt.s32.totalorder %s20, 1
        %s208 = scalar_select %p207, %s20, 1
        %p209 = scmp.lt.s32.totalorder %s21, 0
        %s210 = scalar_select %p209, %s21, 0
        %s211 = smul.addr %s210, 2
        %s212 = smul.addr %s208, 2
        %s213 = sadd.s32 %s211, %s212
        %s214 = smul.addr %s213, 8
        %s215 = scalar_lea.vmem %s1, %s214
        // Predicated region
        $region33: #{tpu_custom_call.1} parent=23 // pred_check
          %p216 = pneg %p84
        $region34: #{tpu_custom_call.1} parent=23 // pred_check_branch
          %218 = sbr.rel (%p216) target = $region36
        $region35: #{tpu_custom_call.1} parent=23 // pred_region
          _
        $region36: #{tpu_custom_call.1} parent=23 // pred_fallthru
          _
      $region24: #{tpu_custom_call.1} parent=5 // pred_fallthru
        _
      %p219 = scmp.le.s32.totalorder 2, %s10
      // Predicated region
      $region37: #{tpu_custom_call.1} parent=5 // pred_check
        %p220 = pneg %p219
      $region38: #{tpu_custom_call.1} parent=5 // pred_check_branch
        %222 = sbr.rel (%p220) target = $region40
      $region39: #{tpu_custom_call.1} parent=5 // pred_region
        %s223 = ssub.s32 %s10, 2
        // Predicated region
        $region41: #{tpu_custom_call.1} parent=39 // pred_check
          %p224 = pneg %p90
        $region42: #{tpu_custom_call.1} parent=39 // pred_check_branch
          %226 = sbr.rel (%p224) target = $region44
        $region43: #{tpu_custom_call.1} parent=39 // pred_region
          %p227 = scmp.lt.s32.totalorder %s23, 1
          %s228 = scalar_select %p227, %s23, 1
          %p229 = scmp.lt.s32.totalorder %s24, 0
          %s230 = scalar_select %p229, %s24, 0
          %s231 = smul.addr %s230, 2
          %s232 = smul.addr %s228, 2
          %s233 = sadd.s32 %s231, %s232
          %s234 = smul.addr %s233, 8
          %s235 = scalar_lea.vmem %s1, %s234
        $region44: #{tpu_custom_call.1} parent=39 // pred_fallthru
          _
      $region40: #{tpu_custom_call.1} parent=5 // pred_fallthru
        _
    $region6: #{tpu_custom_call.1} parent=1 // loop_footer
      %s14 = sadd.s32 1, %s10
    $region7: #{tpu_custom_call.1} parent=1 // loop_footer_branch
      %9 = sbr.rel target = $region3
    $region8: #{tpu_custom_call.1} parent=1 // loop_exit
      _
    %236 = vsyncpa [#allocation3], 1
    %s237 = scalar_lea.sflag [#allocation3], 1
    %238 = vsyncpa %s237, 1

</llo_original>
